<compile_context>
chip_gen: v7x
topology: tpu7x:2x2x1
jax: 0.10.0
libtpu: 0.0.40
codegen_flags: <defaults>
</compile_context>

<pallas_src>
import functools

import jax
import jax.numpy as jnp
from jax.experimental import pallas as pl
from jax.experimental.pallas import tpu as pltpu  # noqa: F401  (kept for TPU-specific tuning hooks)

LANES = 128  # TPU vreg lane width; output slab is lane-dense.


def adapter_kernel(feat_ref, lab_ref,
                   w1_ref, b1_ref, w2_ref, b2_ref, w3p_ref, b3p_ref,
                   out_ref, *, n_classes):
    """Fused adapter MLP + CE terms + argmax for the whole meta-batch (one step).

    feat_ref : [N, E]     bf16   (N = T*B encoder-feature rows)
    lab_ref  : [N, 1]     int32  class labels
    w1/w2    : bf16 weights, b1/b2 f32 biases
    w3p/b3p  : last layer padded to LANES output columns (cols >= C are zero)
    out_ref  : [N, LANES] f32 lane-dense slab:
                 lanes 0..C-1 : logits
                 lane  C      : argmax(logits) as float
                 lane  C+1    : per-row CE term (logsumexp - picked logit)
                 lanes > C+1  : 0
    """
    x = feat_ref[...]                                               # [N, E] bf16

    # Linear(E,F) -> Tanh -> Linear(F,F) -> Tanh -> Linear(F,C padded to LANES)
    h1 = jnp.tanh(jnp.dot(x, w1_ref[...],
                          preferred_element_type=jnp.float32) + b1_ref[...])
    h2 = jnp.tanh(jnp.dot(h1.astype(jnp.bfloat16), w2_ref[...],
                          preferred_element_type=jnp.float32) + b2_ref[...])
    logits_wide = (jnp.dot(h2.astype(jnp.bfloat16), w3p_ref[...],
                           preferred_element_type=jnp.float32)
                   + b3p_ref[...])                                  # [N, LANES] f32

    N, L = logits_wide.shape
    lane = jax.lax.broadcasted_iota(jnp.int32, (N, L), 1)
    valid = lane < n_classes
    labels = lab_ref[...]                                           # [N, 1] int32

    masked = jnp.where(valid, logits_wide, jnp.float32(-1e30))
    m = jnp.max(masked, axis=-1, keepdims=True)                     # [N, 1]

    # argmax(logits) == argmax(softmax(logits)); first-index tie-break.
    pred = jnp.min(jnp.where(masked == m, lane, L), axis=-1, keepdims=True)

    # Stable per-row cross-entropy term: logsumexp(logits) - logits[label].
    e = jnp.where(valid, jnp.exp(logits_wide - m), 0.0)
    lse = m + jnp.log(jnp.sum(e, axis=-1, keepdims=True))
    picked = jnp.sum(jnp.where(lane == labels, logits_wide, 0.0),
                     axis=-1, keepdims=True)
    nll = lse - picked                                              # [N, 1]

    slab = jnp.where(valid, logits_wide, 0.0)
    slab = jnp.where(lane == n_classes, pred.astype(jnp.float32), slab)
    slab = jnp.where(lane == n_classes + 1, nll, slab)
    out_ref[...] = slab


@functools.partial(jax.jit, static_argnames="n_classes")
def adapter_forward(feats, params, labels, n_classes):
    """Fused adapter forward for a meta-batch of T tasks in one pallas_call step.

    feats:  [T, B, E] float32 encoder features (one query batch per task)
    labels: [T, B]    int32 class labels
    Returns:
      logits     [T, B, C] f32  (q_outputs)
      pred       [T, B]    int32 (pre_label_id)
      ce_loss    [T]       f32  (q_loss per task)
      inner_loss [T]       f32  (CE + 1e-4*sqrt(sum_p ||p||^2), the stocbio objective)
    """
    w1, b1, w2, b2, w3, b3 = params
    T, B, E = feats.shape
    F = w1.shape[1]
    C = w3.shape[1]
    assert C == n_classes and C + 2 <= LANES
    N = T * B

    # MXU inputs bf16 (f32 accumulation in-kernel); biases stay f32.
    feats_bf = feats.reshape(N, E).astype(jnp.bfloat16)
    lab2 = labels.reshape(N, 1).astype(jnp.int32)
    w1b, w2b = w1.astype(jnp.bfloat16), w2.astype(jnp.bfloat16)
    b1r = b1.reshape(1, F).astype(jnp.float32)
    b2r = b2.reshape(1, F).astype(jnp.float32)
    # Last layer padded to a lane-dense 128-wide output (extra columns are zero),
    # so the kernel writes a single unmasked [N, 128] slab.
    w3p = jnp.zeros((F, LANES), jnp.bfloat16).at[:, :C].set(w3.astype(jnp.bfloat16))
    b3p = jnp.zeros((1, LANES), jnp.float32).at[:, :C].set(
        b3.reshape(1, C).astype(jnp.float32))

    # Single step: no grid, whole (tiny) operands resident in VMEM.
    # For production-scale T, grid over task chunks (Tc*B >= 128 rows per step)
    # with constant-index weight BlockSpecs; re-derive VMEM budget vs v7x's 64 MiB.
    kernel = functools.partial(adapter_kernel, n_classes=n_classes)
    slab = pl.pallas_call(
        kernel,
        out_shape=jax.ShapeDtypeStruct((N, LANES), jnp.float32),
    )(feats_bf, lab2, w1b, b1r, w2b, b2r, w3p, b3p)

    logits = slab[:, :C].reshape(T, B, C)
    pred = slab[:, C].astype(jnp.int32).reshape(T, B)
    ce_loss = jnp.mean(slab[:, C + 1].reshape(T, B), axis=-1)

    # Regularizer hoisted out of the kernel: f32 over the original parameters,
    # computed once (identical for every task), matching the PyTorch f32 path.
    reg_sq = sum(jnp.sum(p.astype(jnp.float32) ** 2) for p in params)
    inner_loss = ce_loss + 1e-4 * jnp.sqrt(reg_sq)

    return logits, pred, ce_loss, inner_loss


def init_adapter_params(key, encoder_dim, fc_dim, n_classes):
    """Deterministic init mimicking torch.nn.Linear (U[-1/sqrt(fan_in), +])."""
    ks = jax.random.split(key, 6)

    def lin(kw, kb, fan_in, fan_out):
        bound = 1.0 / jnp.sqrt(jnp.float32(fan_in))
        w = jax.random.uniform(kw, (fan_in, fan_out), jnp.float32, -bound, bound)
        b = jax.random.uniform(kb, (fan_out,), jnp.float32, -bound, bound)
        return w, b

    w1, b1 = lin(ks[0], ks[1], encoder_dim, fc_dim)
    w2, b2 = lin(ks[2], ks[3], fc_dim, fc_dim)
    w3, b3 = lin(ks[4], ks[5], fc_dim, n_classes)
    return (w1, b1, w2, b2, w3, b3)


if __name__ == "__main__":
    # Small shapes consistent with the module: T tasks per meta-batch, query
    # batch=8, encoder_dim=32, fc_dim=32, n_classes=8.
    T, B, E, Fdim, C = 4, 8, 32, 32, 8

    key = jax.random.PRNGKey(0)
    k_feat, k_lab, k_par = jax.random.split(key, 3)

    # Encoder features standing in for predict(meta_model, q_input) -> [T, B, E]
    feats = jax.random.normal(k_feat, (T, B, E), jnp.float32)
    labels = jax.random.randint(k_lab, (T, B), 0, C, jnp.int32)
    params = init_adapter_params(k_par, E, Fdim, C)

    logits, pred, ce_loss, inner_loss = adapter_forward(feats, params, labels, C)
    jax.block_until_ready((logits, pred, ce_loss, inner_loss))

    # Pure-JAX reference mirroring the kernel's bf16-input / f32-accumulate data flow.
    w1, b1, w2, b2, w3, b3 = params
    bf = jnp.bfloat16
    x = feats.astype(bf)
    h1 = jnp.tanh(jnp.einsum("tbe,ef->tbf", x, w1.astype(bf),
                             preferred_element_type=jnp.float32) + b1)
    h2 = jnp.tanh(jnp.einsum("tbf,fg->tbg", h1.astype(bf), w2.astype(bf),
                             preferred_element_type=jnp.float32) + b2)
    ref_logits = jnp.einsum("tbg,gc->tbc", h2.astype(bf), w3.astype(bf),
                            preferred_element_type=jnp.float32) + b3
    ref_lse = jax.nn.logsumexp(ref_logits, axis=-1)
    ref_picked = jnp.take_along_axis(ref_logits, labels[..., None], axis=-1)[..., 0]
    ref_ce = jnp.mean(ref_lse - ref_picked, axis=-1)
    ref_reg_sq = sum(jnp.sum(p.astype(jnp.float32) ** 2) for p in params)
    ref_inner = ref_ce + 1e-4 * jnp.sqrt(ref_reg_sq)

    assert jnp.allclose(logits, ref_logits, atol=5e-3, rtol=5e-3)
    assert jnp.array_equal(pred, jnp.argmax(logits, axis=-1))
    assert jnp.allclose(ce_loss, ref_ce, atol=5e-3, rtol=5e-3)
    assert jnp.allclose(inner_loss, ref_inner, atol=5e-3, rtol=5e-3)

    print("KERNEL_OK")
</pallas_src>

<mosaic_0001>
module attributes {stable_mosaic.version = 11 : i64} {
  func.func @adapter_kernel(%arg0: memref<32x32xbf16, #tpu.memory_space<vmem>>, %arg1: memref<32x1xi32, #tpu.memory_space<vmem>>, %arg2: memref<32x32xbf16, #tpu.memory_space<vmem>>, %arg3: memref<1x32xf32, #tpu.memory_space<vmem>>, %arg4: memref<32x32xbf16, #tpu.memory_space<vmem>>, %arg5: memref<1x32xf32, #tpu.memory_space<vmem>>, %arg6: memref<32x128xbf16, #tpu.memory_space<vmem>>, %arg7: memref<1x128xf32, #tpu.memory_space<vmem>>, %arg8: memref<32x128xf32, #tpu.memory_space<vmem>>) attributes {dimension_semantics = [], scalar_prefetch = 0 : i64, scratch_operands = 0 : i64, tpu.core_type = #tpu.core_type<tc>} {
    %c0 = arith.constant 0 : index
    %c0_0 = arith.constant 0 : index
    %0 = vector.load %arg0[%c0, %c0_0] : memref<32x32xbf16, #tpu.memory_space<vmem>>, vector<32x32xbf16>
    %c0_1 = arith.constant 0 : index
    %c0_2 = arith.constant 0 : index
    %1 = vector.load %arg2[%c0_1, %c0_2] : memref<32x32xbf16, #tpu.memory_space<vmem>>, vector<32x32xbf16>
    %cst = arith.constant dense<0.000000e+00> : vector<32x32xf32>
    %2 = tpu.matmul %0, %1, %cst {dimension_numbers = #tpu.dot_dimension_numbers<[1], [0], [0], [1], [0, 0, 1, 1], [], []>} : vector<32x32xbf16>, vector<32x32xbf16>, vector<32x32xf32> -> vector<32x32xf32>
    %c0_3 = arith.constant 0 : index
    %c0_4 = arith.constant 0 : index
    %3 = vector.load %arg3[%c0_3, %c0_4] : memref<1x32xf32, #tpu.memory_space<vmem>>, vector<1x32xf32>
    %4 = vector.broadcast %3 : vector<1x32xf32> to vector<32x32xf32>
    %5 = arith.addf %2, %4 : vector<32x32xf32>
    %6 = math.tanh %5 : vector<32x32xf32>
    %7 = arith.truncf %6 : vector<32x32xf32> to vector<32x32xbf16>
    %c0_5 = arith.constant 0 : index
    %c0_6 = arith.constant 0 : index
    %8 = vector.load %arg4[%c0_5, %c0_6] : memref<32x32xbf16, #tpu.memory_space<vmem>>, vector<32x32xbf16>
    %cst_7 = arith.constant dense<0.000000e+00> : vector<32x32xf32>
    %9 = tpu.matmul %7, %8, %cst_7 {dimension_numbers = #tpu.dot_dimension_numbers<[1], [0], [0], [1], [0, 0, 1, 1], [], []>} : vector<32x32xbf16>, vector<32x32xbf16>, vector<32x32xf32> -> vector<32x32xf32>
    %c0_8 = arith.constant 0 : index
    %c0_9 = arith.constant 0 : index
    %10 = vector.load %arg5[%c0_8, %c0_9] : memref<1x32xf32, #tpu.memory_space<vmem>>, vector<1x32xf32>
    %11 = vector.broadcast %10 : vector<1x32xf32> to vector<32x32xf32>
    %12 = arith.addf %9, %11 : vector<32x32xf32>
    %13 = math.tanh %12 : vector<32x32xf32>
    %14 = arith.truncf %13 : vector<32x32xf32> to vector<32x32xbf16>
    %c0_10 = arith.constant 0 : index
    %c0_11 = arith.constant 0 : index
    %15 = vector.load %arg6[%c0_10, %c0_11] : memref<32x128xbf16, #tpu.memory_space<vmem>>, vector<32x128xbf16>
    %cst_12 = arith.constant dense<0.000000e+00> : vector<32x128xf32>
    %16 = tpu.matmul %14, %15, %cst_12 {dimension_numbers = #tpu.dot_dimension_numbers<[1], [0], [0], [1], [0, 0, 1, 1], [], []>} : vector<32x32xbf16>, vector<32x128xbf16>, vector<32x128xf32> -> vector<32x128xf32>
    %c0_13 = arith.constant 0 : index
    %c0_14 = arith.constant 0 : index
    %17 = vector.load %arg7[%c0_13, %c0_14] : memref<1x128xf32, #tpu.memory_space<vmem>>, vector<1x128xf32>
    %18 = vector.broadcast %17 : vector<1x128xf32> to vector<32x128xf32>
    %19 = arith.addf %16, %18 : vector<32x128xf32>
    %20 = tpu.iota {dimensions = array<i32: 1>} : vector<32x128xi32>
    %c8_i32 = arith.constant 8 : i32
    %21 = vector.broadcast %c8_i32 : i32 to vector<32x128xi32>
    %22 = arith.cmpi slt, %20, %21 : vector<32x128xi32>
    %c0_15 = arith.constant 0 : index
    %c0_16 = arith.constant 0 : index
    %23 = vector.load %arg1[%c0_15, %c0_16] : memref<32x1xi32, #tpu.memory_space<vmem>>, vector<32x1xi32>
    %cst_17 = arith.constant -1.000000e+30 : f32
    %24 = vector.broadcast %cst_17 : f32 to vector<32x128xf32>
    %25 = arith.select %22, %19, %24 : vector<32x128xi1>, vector<32x128xf32>
    %cst_18 = arith.constant dense<0xFF800000> : vector<32xf32>
    %26 = vector.multi_reduction <maximumf>, %25, %cst_18 [1] : vector<32x128xf32> to vector<32xf32>
    %27 = vector.shape_cast %26 : vector<32xf32> to vector<32x1xf32>
    %28 = vector.broadcast %27 : vector<32x1xf32> to vector<32x128xf32>
    %29 = arith.cmpf oeq, %25, %28 : vector<32x128xf32>
    %c128_i32 = arith.constant 128 : i32
    %30 = vector.broadcast %c128_i32 : i32 to vector<32x128xi32>
    %31 = arith.select %29, %20, %30 : vector<32x128xi1>, vector<32x128xi32>
    %cst_19 = arith.constant dense<2147483647> : vector<32xi32>
    %32 = vector.multi_reduction <minsi>, %31, %cst_19 [1] : vector<32x128xi32> to vector<32xi32>
    %33 = vector.shape_cast %32 : vector<32xi32> to vector<32x1xi32>
    %34 = vector.broadcast %27 : vector<32x1xf32> to vector<32x128xf32>
    %35 = arith.subf %19, %34 : vector<32x128xf32>
    %36 = math.exp %35 : vector<32x128xf32>
    %cst_20 = arith.constant 0.000000e+00 : f32
    %37 = vector.broadcast %cst_20 : f32 to vector<32x128xf32>
    %38 = arith.select %22, %36, %37 : vector<32x128xi1>, vector<32x128xf32>
    %cst_21 = arith.constant dense<0.000000e+00> : vector<32xf32>
    %39 = vector.multi_reduction <add>, %38, %cst_21 [1] : vector<32x128xf32> to vector<32xf32>
    %40 = vector.shape_cast %39 : vector<32xf32> to vector<32x1xf32>
    %41 = math.log %40 : vector<32x1xf32>
    %42 = arith.addf %27, %41 : vector<32x1xf32>
    %43 = vector.broadcast %23 : vector<32x1xi32> to vector<32x128xi32>
    %44 = arith.cmpi eq, %20, %43 : vector<32x128xi32>
    %cst_22 = arith.constant 0.000000e+00 : f32
    %45 = vector.broadcast %cst_22 : f32 to vector<32x128xf32>
    %46 = arith.select %44, %19, %45 : vector<32x128xi1>, vector<32x128xf32>
    %cst_23 = arith.constant dense<0.000000e+00> : vector<32xf32>
    %47 = vector.multi_reduction <add>, %46, %cst_23 [1] : vector<32x128xf32> to vector<32xf32>
    %48 = vector.shape_cast %47 : vector<32xf32> to vector<32x1xf32>
    %49 = arith.subf %42, %48 : vector<32x1xf32>
    %cst_24 = arith.constant 0.000000e+00 : f32
    %50 = vector.broadcast %cst_24 : f32 to vector<32x128xf32>
    %51 = arith.select %22, %19, %50 : vector<32x128xi1>, vector<32x128xf32>
    %c8_i32_25 = arith.constant 8 : i32
    %52 = vector.broadcast %c8_i32_25 : i32 to vector<32x128xi32>
    %53 = arith.cmpi eq, %20, %52 : vector<32x128xi32>
    %54 = arith.sitofp %33 : vector<32x1xi32> to vector<32x1xf32>
    %55 = vector.shape_cast %54 : vector<32x1xf32> to vector<32x1xf32>
    %56 = vector.broadcast %55 : vector<32x1xf32> to vector<32x128xf32>
    %57 = arith.select %53, %56, %51 : vector<32x128xi1>, vector<32x128xf32>
    %c9_i32 = arith.constant 9 : i32
    %58 = vector.broadcast %c9_i32 : i32 to vector<32x128xi32>
    %59 = arith.cmpi eq, %20, %58 : vector<32x128xi32>
    %60 = vector.shape_cast %49 : vector<32x1xf32> to vector<32x1xf32>
    %61 = vector.broadcast %60 : vector<32x1xf32> to vector<32x128xf32>
    %62 = arith.select %59, %61, %57 : vector<32x128xi1>, vector<32x128xf32>
    %c0_26 = arith.constant 0 : index
    %c0_27 = arith.constant 0 : index
    %63 = vector.load %arg8[%c0_26, %c0_27] : memref<32x128xf32, #tpu.memory_space<vmem>>, vector<32x128xf32>
    tpu.vector_store %arg8[%c0_26, %c0_27], %62 {strides = array<i32>} : memref<32x128xf32, #tpu.memory_space<vmem>>, vector<32x128xf32>,
    return
  }
}

</mosaic_0001>

<llo_original>
// kernel: squeeze.3
$region0: #{squeeze.3}
  %s0 = inlined_call_operand.vmem [shape: f32[32], index: 0, kind: input, shape index: {}]
  %s1 = inlined_call_operand.vmem [shape: f32[4,8], index: 1, kind: output, shape index: {}]
  $region1: #{squeeze.3} parent=0
    #allocation0 [shape = 'u8[4096]{0}', space=vmem, size = 0x1000, scoped, tag = 'scoped mem for output reshape']
    #allocation1 [shape = 'u8[4096]{0}', space=vmem, size = 0x1000, scoped, tag = 'scoped mem for input reshape']
    %s3 = sshllo.u32 0, 1
    %v4 = vld [vmem:[%s0] sm:%s3]
    %5 = vst [vmem:[#allocation1] sm:%s3] %v4
    %v6 = vld [vmem:[#allocation1] sm:$0x1]
    %vm7 = vcmask 64512
    %8 = vst.msk [vmem:[#allocation0] sm:$0x1] %vm7, %v6
    %v9 = vld [vmem:[#allocation1] sm:$0x1]
    %10 = vrot.lane.b32.xlu0 %v9, 120
    %v11 = vpop.permute.xlu0 %10
    %vm12 = vcmask 64512
    %s13 = scalar_lea.vmem [#allocation0], 1
    %14 = vst.msk [vmem:[%s13] sm:$0x1] %vm12, %v11
    %v15 = vld [vmem:[#allocation1] sm:$0x1]
    %16 = vrot.lane.b32.xlu0 %v15, 112
    %v17 = vpop.permute.xlu0 %16
    %vm18 = vcmask 64512
    %s19 = scalar_lea.vmem [#allocation0], 2
    %20 = vst.msk [vmem:[%s19] sm:$0x1] %vm18, %v17
    %v21 = vld [vmem:[#allocation1] sm:$0x1]
    %22 = vrot.lane.b32.xlu0 %v21, 104
    %v23 = vpop.permute.xlu0 %22
    %vm24 = vcmask 64512
    %s25 = scalar_lea.vmem [#allocation0], 3
    %26 = vst.msk [vmem:[%s25] sm:$0x1] %vm24, %v23
    %s28 = sshllo.u32 0, 4
    %v30 = vld [vmem:[#allocation0] sm:%s28]
    %s31 = sshllo.u32 0, 4
    %32 = vst [vmem:[%s1] sm:%s31] %v30

// kernel: adapter_forward.1
$region0: #{adapter_forward.1}
  #allocation0 [shape = 'u32[]', space=smem, size = 0x4, offset = 0x4, fixed_abs, tag = 'smem constant byte address 0x4 - core index']
  #allocation1 [shape = 'u32[144,128]{1,0:T(1,128)}', space=vmem, size = 0x12000, scoped, tag = 'internal scratch']
  %s0 = inlined_call_operand.vmem [shape: bf16[32,32], index: 0, kind: input, shape index: {}]
  %s1 = inlined_call_operand.vmem [shape: s32[32,1], index: 1, kind: input, shape index: {}]
  %s2 = inlined_call_operand.vmem [shape: bf16[32,32], index: 2, kind: input, shape index: {}]
  %s3 = inlined_call_operand.vmem [shape: f32[1,32], index: 3, kind: input, shape index: {}]
  %s4 = inlined_call_operand.vmem [shape: bf16[32,32], index: 4, kind: input, shape index: {}]
  %s5 = inlined_call_operand.vmem [shape: f32[1,32], index: 5, kind: input, shape index: {}]
  %s6 = inlined_call_operand.vmem [shape: bf16[32,128], index: 6, kind: input, shape index: {}]
  %s7 = inlined_call_operand.vmem [shape: f32[1,128], index: 7, kind: input, shape index: {}]
  %s8 = inlined_call_operand.vmem [shape: f32[32,128], index: 8, kind: output, shape index: {}]
  %s9 = sld [smem:[#allocation0]]
  $region42: #{adapter_forward.1} parent=0
    _
  %s11 = ssub.s32 1, %s9
  %s12 = scalar_select 0, %s11, %s9
  // Predicated region
  $region2: #{adapter_forward.1} parent=0 // pred_check
    _
  $region3: #{adapter_forward.1} parent=0 // pred_check_branch
    %14 = sbr.rel (0) target = $region5
  $region4: #{adapter_forward.1} parent=0 // pred_region
    _
  $region5: #{adapter_forward.1} parent=0 // pred_fallthru
    _
  // Predicated region
  $region6: #{adapter_forward.1} parent=0 // pred_check
    _
  $region7: #{adapter_forward.1} parent=0 // pred_check_branch
    %16 = sbr.rel (0) target = $region9
  $region8: #{adapter_forward.1} parent=0 // pred_region
    _
  $region9: #{adapter_forward.1} parent=0 // pred_fallthru
    _
  // Predicated region
  $region10: #{adapter_forward.1} parent=0 // pred_check
    _
  $region11: #{adapter_forward.1} parent=0 // pred_check_branch
    %18 = sbr.rel (0) target = $region13
  $region12: #{adapter_forward.1} parent=0 // pred_region
    _
  $region13: #{adapter_forward.1} parent=0 // pred_fallthru
    _
  // Predicated region
  $region14: #{adapter_forward.1} parent=0 // pred_check
    _
  $region15: #{adapter_forward.1} parent=0 // pred_check_branch
    %20 = sbr.rel (0) target = $region17
  $region16: #{adapter_forward.1} parent=0 // pred_region
    _
  $region17: #{adapter_forward.1} parent=0 // pred_fallthru
    _
  // Predicated region
  $region18: #{adapter_forward.1} parent=0 // pred_check
    _
  $region19: #{adapter_forward.1} parent=0 // pred_check_branch
    %22 = sbr.rel (0) target = $region21
  $region20: #{adapter_forward.1} parent=0 // pred_region
    _
  $region21: #{adapter_forward.1} parent=0 // pred_fallthru
    _
  // Predicated region
  $region22: #{adapter_forward.1} parent=0 // pred_check
    _
  $region23: #{adapter_forward.1} parent=0 // pred_check_branch
    %24 = sbr.rel (0) target = $region25
  $region24: #{adapter_forward.1} parent=0 // pred_region
    _
  $region25: #{adapter_forward.1} parent=0 // pred_fallthru
    _
  // Predicated region
  $region26: #{adapter_forward.1} parent=0 // pred_check
    _
  $region27: #{adapter_forward.1} parent=0 // pred_check_branch
    %26 = sbr.rel (0) target = $region29
  $region28: #{adapter_forward.1} parent=0 // pred_region
    _
  $region29: #{adapter_forward.1} parent=0 // pred_fallthru
    _
  // Predicated region
  $region30: #{adapter_forward.1} parent=0 // pred_check
    _
  $region31: #{adapter_forward.1} parent=0 // pred_check_branch
    %28 = sbr.rel (0) target = $region33
  $region32: #{adapter_forward.1} parent=0 // pred_region
    _
  $region33: #{adapter_forward.1} parent=0 // pred_fallthru
    _
  %v30 = vld [vmem:[%s0] sm:$0xf]
  %v31 = vld [vmem:[%s0 + $0x4] sm:$0xf]
  %v32 = vld [vmem:[%s0 + $0x8] sm:$0xf]
  %v33 = vld [vmem:[%s0 + $0xc] sm:$0xf]
  %v34 = vld [vmem:[%s2] sm:$0xf]
  %v35 = vld [vmem:[%s2 + $0x4] sm:$0xf]
  %v36 = vld [vmem:[%s2 + $0x8] sm:$0xf]
  %v37 = vld [vmem:[%s2 + $0xc] sm:$0xf]
  %v38 = vld [vmem:[%s3] sm:$0x1]
  %v40 = vlaneseq
  %v41 = vshrl.u32 %v40, 7
  %v42 = vsub.s32 0, %v41
  %v43 = vrot.slane %v38, %v42
  %v49 = vunpack.c.l.b16 %v30
  %v50 = vunpack.c.l.b16 %v31
  %v51 = vunpack.c.l.b16 %v32
  %v52 = vunpack.c.l.b16 %v33
  %v53 = vpack.c.b16 %v50, %v49
  %v54 = vpack.c.b16 %v52, %v51
  %v59 = vunpack.c.l.b16 %v34
  %v60 = vunpack.c.l.b16 %v35
  %v61 = vunpack.c.l.b16 %v36
  %v62 = vunpack.c.l.b16 %v37
  %v63 = vpack.c.b16 %v60, %v59
  %v64 = vpack.c.b16 %v62, %v61
  %vm67 = vcmask 261120
  %v69 = vsel %vm67, %v53, 0
  %v72 = vsel %vm67, %v54, 0
  %74 = vmatprep.subr.bf16.mxu0 0
  %75 = vmatpush1.bf16.msra.mxu0 %v63
  %76 = vmatprep.subr.bf16.mxu0 0
  %77 = vmatpush1.bf16.msra.mxu0 %v64
  %78 = vmatprep.subr.bf16.mxu0 0
  %79 = vmatpush1.bf16.msra.mxu0 0
  %80 = vmatprep.subr.bf16.mxu0 0
  %81 = vmatpush1.bf16.msra.mxu0 0
  %82 = vmatprep.subr.bf16.mxu0 0
  %83 = vmatpush1.bf16.msra.mxu0 0
  %84 = vmatprep.subr.bf16.mxu0 0
  %85 = vmatpush1.bf16.msra.mxu0 0
  %86 = vmatprep.subr.bf16.mxu0 0
  %87 = vmatpush1.bf16.msra.mxu0 0
  %88 = vmatprep.subr.bf16.mxu0 0
  %89 = vmatpush1.bf16.msra.mxu0 0
  %90 = vmatprep.subr.bf16.mxu0 0
  %91 = vmatpush1.bf16.msra.mxu0 0
  %92 = vmatprep.subr.bf16.mxu0 0
  %93 = vmatpush1.bf16.msra.mxu0 0
  %94 = vmatprep.subr.bf16.mxu0 0
  %95 = vmatpush1.bf16.msra.mxu0 0
  %96 = vmatprep.subr.bf16.mxu0 0
  %97 = vmatpush1.bf16.msra.mxu0 0
  %98 = vmatprep.subr.bf16.mxu0 0
  %99 = vmatpush1.bf16.msra.mxu0 0
  %100 = vmatprep.subr.bf16.mxu0 0
  %101 = vmatpush1.bf16.msra.mxu0 0
  %102 = vmatprep.subr.bf16.mxu0 0
  %103 = vmatpush1.bf16.msra.mxu0 0
  %104 = vmatprep.subr.bf16.mxu0 0
  %105 = vmatpush1.bf16.msra.mxu0 0
  %106 = vmatprep.mubr.bf16.mxu0 0
  %107 = vmatmul.mubr.bf16.gmra.mrb[0].mxu0 %v69
  %v108 = vpop.f32.mrb[0].mxu0
  %v109 = vadd.f32 %v43, %v108
  %v110 = vpop.f32.mrb[0].mxu0
  %v111 = vpop.f32.mrb[0].mxu0
  %v112 = vadd.f32 %v43, %v111
  %v113 = vpop.f32.mrb[0].mxu0
  %114 = vmatprep.mubr.bf16.mxu0 0
  %115 = vmatmul.mubr.bf16.gmra.mrb[0].mxu0 %v72
  %v116 = vpop.f32.mrb[0].mxu0
  %v117 = vadd.f32 %v43, %v116
  %v118 = vpop.f32.mrb[0].mxu0
  %v119 = vpop.f32.mrb[0].mxu0
  %v120 = vadd.f32 %v43, %v119
  %v121 = vpop.f32.mrb[0].mxu0
  %122 = vdwg.mxu0
  %v123 = vtanh.pop %v109
  %v124 = vtanh.pop %v112
  %v125 = vtanh.pop %v117
  %v126 = vtanh.pop %v120
  %v127 = vpack.c.bf16 %v124, %v123
  %v128 = vpack.c.bf16 %v126, %v125
  %v129 = vld [vmem:[%s4] sm:$0xf]
  %v130 = vld [vmem:[%s4 + $0x4] sm:$0xf]
  %v131 = vld [vmem:[%s4 + $0x8] sm:$0xf]
  %v132 = vld [vmem:[%s4 + $0xc] sm:$0xf]
  %v133 = vld [vmem:[%s5] sm:$0x1]
  %v135 = vlaneseq
  %v136 = vshrl.u32 %v135, 7
  %v137 = vsub.s32 0, %v136
  %v138 = vrot.slane %v133, %v137
  %v144 = vunpack.c.l.b16 %v129
  %v145 = vunpack.c.l.b16 %v130
  %v146 = vunpack.c.l.b16 %v131
  %v147 = vunpack.c.l.b16 %v132
  %v148 = vpack.c.b16 %v145, %v144
  %v149 = vpack.c.b16 %v147, %v146
  %v153 = vsel %vm67, %v127, 0
  %v156 = vsel %vm67, %v128, 0
  %158 = vmatprep.subr.bf16.mxu0 0
  %159 = vmatpush1.bf16.msra.mxu0 %v148
  %160 = vmatprep.subr.bf16.mxu0 0
  %161 = vmatpush1.bf16.msra.mxu0 %v149
  %162 = vmatprep.subr.bf16.mxu0 0
  %163 = vmatpush1.bf16.msra.mxu0 0
  %164 = vmatprep.subr.bf16.mxu0 0
  %165 = vmatpush1.bf16.msra.mxu0 0
  %166 = vmatprep.subr.bf16.mxu0 0
  %167 = vmatpush1.bf16.msra.mxu0 0
  %168 = vmatprep.subr.bf16.mxu0 0
  %169 = vmatpush1.bf16.msra.mxu0 0
  %170 = vmatprep.subr.bf16.mxu0 0
  %171 = vmatpush1.bf16.msra.mxu0 0
  %172 = vmatprep.subr.bf16.mxu0 0
  %173 = vmatpush1.bf16.msra.mxu0 0
  %174 = vmatprep.subr.bf16.mxu0 0
  %175 = vmatpush1.bf16.msra.mxu0 0
  %176 = vmatprep.subr.bf16.mxu0 0
  %177 = vmatpush1.bf16.msra.mxu0 0
  %178 = vmatprep.subr.bf16.mxu0 0
  %179 = vmatpush1.bf16.msra.mxu0 0
  %180 = vmatprep.subr.bf16.mxu0 0
  %181 = vmatpush1.bf16.msra.mxu0 0
  %182 = vmatprep.subr.bf16.mxu0 0
  %183 = vmatpush1.bf16.msra.mxu0 0
  %184 = vmatprep.subr.bf16.mxu0 0
  %185 = vmatpush1.bf16.msra.mxu0 0
  %186 = vmatprep.subr.bf16.mxu0 0
  %187 = vmatpush1.bf16.msra.mxu0 0
  %188 = vmatprep.subr.bf16.mxu0 0
  %189 = vmatpush1.bf16.msra.mxu0 0
  %190 = vmatprep.mubr.bf16.mxu0 0
  %191 = vmatmul.mubr.bf16.gmra.mrb[0].mxu0 %v153
  %v192 = vpop.f32.mrb[0].mxu0
  %v193 = vadd.f32 %v138, %v192
  %v194 = vpop.f32.mrb[0].mxu0
  %v195 = vpop.f32.mrb[0].mxu0
  %v196 = vadd.f32 %v138, %v195
  %v197 = vpop.f32.mrb[0].mxu0
  %198 = vmatprep.mubr.bf16.mxu0 0
  %199 = vmatmul.mubr.bf16.gmra.mrb[0].mxu0 %v156
  %v200 = vpop.f32.mrb[0].mxu0
  %v201 = vadd.f32 %v138, %v200
  %v202 = vpop.f32.mrb[0].mxu0
  %v203 = vpop.f32.mrb[0].mxu0
  %v204 = vadd.f32 %v138, %v203
  %v205 = vpop.f32.mrb[0].mxu0
  %206 = vdwg.mxu0
  %v207 = vtanh.pop %v193
  %v208 = vtanh.pop %v196
  %v209 = vtanh.pop %v201
  %v210 = vtanh.pop %v204
  %v211 = vpack.c.bf16 %v208, %v207
  %v212 = vpack.c.bf16 %v210, %v209
  %v213 = vld [vmem:[%s6] sm:$0xf]
  %v214 = vld [vmem:[%s6 + $0x4] sm:$0xf]
  %v215 = vld [vmem:[%s6 + $0x8] sm:$0xf]
  %v216 = vld [vmem:[%s6 + $0xc] sm:$0xf]
  %v217 = vld [vmem:[%s7] sm:$0x1]
  %v219 = vlaneseq
  %v220 = vshrl.u32 %v219, 7
  %v221 = vsub.s32 0, %v220
  %v222 = vrot.slane %v217, %v221
  %v228 = vunpack.c.l.b16 %v213
  %v229 = vunpack.c.l.b16 %v214
  %v230 = vunpack.c.l.b16 %v215
  %v231 = vunpack.c.l.b16 %v216
  %v232 = vpack.c.b16 %v229, %v228
  %v233 = vpack.c.b16 %v231, %v230
  %v237 = vsel %vm67, %v211, 0
  %v240 = vsel %vm67, %v212, 0
  %242 = vmatprep.subr.bf16.mxu0 0
  %243 = vmatpush1.bf16.msra.mxu0 %v232
  %244 = vmatprep.subr.bf16.mxu0 0
  %245 = vmatpush1.bf16.msra.mxu0 %v233
  %246 = vmatprep.subr.bf16.mxu0 0
  %247 = vmatpush1.bf16.msra.mxu0 0
  %248 = vmatprep.subr.bf16.mxu0 0
  %249 = vmatpush1.bf16.msra.mxu0 0
  %250 = vmatprep.subr.bf16.mxu0 0
  %251 = vmatpush1.bf16.msra.mxu0 0
  %252 = vmatprep.subr.bf16.mxu0 0
  %253 = vmatpush1.bf16.msra.mxu0 0
  %254 = vmatprep.subr.bf16.mxu0 0
  %255 = vmatpush1.bf16.msra.mxu0 0
  %256 = vmatprep.subr.bf16.mxu0 0
  %257 = vmatpush1.bf16.msra.mxu0 0
  %258 = vmatprep.subr.bf16.mxu0 0
  %259 = vmatpush1.bf16.msra.mxu0 0
  %260 = vmatprep.subr.bf16.mxu0 0
  %261 = vmatpush1.bf16.msra.mxu0 0
  %262 = vmatprep.subr.bf16.mxu0 0
  %263 = vmatpush1.bf16.msra.mxu0 0
  %264 = vmatprep.subr.bf16.mxu0 0
  %265 = vmatpush1.bf16.msra.mxu0 0
  %266 = vmatprep.subr.bf16.mxu0 0
  %267 = vmatpush1.bf16.msra.mxu0 0
  %268 = vmatprep.subr.bf16.mxu0 0
  %269 = vmatpush1.bf16.msra.mxu0 0
  %270 = vmatprep.subr.bf16.mxu0 0
  %271 = vmatpush1.bf16.msra.mxu0 0
  %272 = vmatprep.subr.bf16.mxu0 0
  %273 = vmatpush1.bf16.msra.mxu0 0
  %274 = vmatprep.mubr.bf16.mxu0 0
  %275 = vmatmul.mubr.bf16.gmra.mrb[0].mxu0 %v237
  %v276 = vpop.f32.mrb[0].mxu0
  %v277 = vadd.f32 %v222, %v276
  %v278 = vpop.f32.mrb[0].mxu0
  %v279 = vpop.f32.mrb[0].mxu0
  %v280 = vadd.f32 %v222, %v279
  %v281 = vpop.f32.mrb[0].mxu0
  %282 = vmatprep.mubr.bf16.mxu0 0
  %283 = vmatmul.mubr.bf16.gmra.mrb[0].mxu0 %v240
  %v284 = vpop.f32.mrb[0].mxu0
  %v285 = vadd.f32 %v222, %v284
  %v286 = vpop.f32.mrb[0].mxu0
  %v287 = vpop.f32.mrb[0].mxu0
  %v288 = vadd.f32 %v222, %v287
  %v289 = vpop.f32.mrb[0].mxu0
  %290 = vdwg.mxu0
  %v291 = vlaneseq
  %v292 = vand.u32 %v291, 127
  %vm293 = vcmp.lt.s32.totalorder %v292, 8
  %v294 = vld [vmem:[%s1] sm:$0xff]
  %v295 = vld [vmem:[%s1 + $0x8] sm:$0xff]
  %v296 = vld [vmem:[%s1 + $0x10] sm:$0xff]
  %v297 = vld [vmem:[%s1 + $0x18] sm:$0xff]
  %v298 = vsel %vm293, %v277, -1e+30
  %v299 = vsel %vm293, %v280, -1e+30
  %v300 = vsel %vm293, %v285, -1e+30
  %v301 = vsel %vm293, %v288, -1e+30
  %302 = vmax.xlane.f32.xlu0 %v298
  %v303 = vpop.xlane.xlu0 %302
  %304 = vmax.xlane.f32.xlu0 %v299
  %v305 = vpop.xlane.xlu0 %304
  %306 = vmax.xlane.f32.xlu0 %v300
  %v307 = vpop.xlane.xlu0 %306
  %308 = vmax.xlane.f32.xlu0 %v301
  %v309 = vpop.xlane.xlu0 %308
  %vm310 = vcmp.eq.f32.partialorder %v298, %v303
  %vm311 = vcmp.eq.f32.partialorder %v299, %v305
  %vm312 = vcmp.eq.f32.partialorder %v300, %v307
  %vm313 = vcmp.eq.f32.partialorder %v301, %v309
  %v314 = vsel %vm310, %v292, 128
  %v315 = vsel %vm311, %v292, 128
  %v316 = vsel %vm312, %v292, 128
  %v317 = vsel %vm313, %v292, 128
  %v318 = vand.u32 %v314, 65535
  %v319 = vshra.s32 %v314, 16
  %v320 = vcvt.s32.f32 %v318
  %v321 = vcvt.s32.f32 %v319
  %322 = vmin.xlane.f32.xlu0 %v321
  %v323 = vpop.xlane.xlu0 %322
  %vm324 = vcmp.eq.f32.partialorder %v321, %v323
  %v325 = vsel %vm324, %v320, inf
  %326 = vmin.xlane.f32.xlu0 %v325
  %v327 = vpop.xlane.xlu0 %326
  %v328 = vcvt.f32.s32 %v327
  %v329 = vcvt.f32.s32 %v323
  %v330 = vshll.u32 %v329, 16
  %v331 = vadd.s32 %v330, %v328
  %v332 = vand.u32 %v315, 65535
  %v333 = vshra.s32 %v315, 16
  %v334 = vcvt.s32.f32 %v332
  %v335 = vcvt.s32.f32 %v333
  %336 = vmin.xlane.f32.xlu0 %v335
  %v337 = vpop.xlane.xlu0 %336
  %vm338 = vcmp.eq.f32.partialorder %v335, %v337
  %v339 = vsel %vm338, %v334, inf
  %340 = vmin.xlane.f32.xlu0 %v339
  %v341 = vpop.xlane.xlu0 %340
  %v342 = vcvt.f32.s32 %v341
  %v343 = vcvt.f32.s32 %v337
  %v344 = vshll.u32 %v343, 16
  %v345 = vadd.s32 %v344, %v342
  %v346 = vand.u32 %v316, 65535
  %v347 = vshra.s32 %v316, 16
  %v348 = vcvt.s32.f32 %v346
  %v349 = vcvt.s32.f32 %v347
  %350 = vmin.xlane.f32.xlu0 %v349
  %v351 = vpop.xlane.xlu0 %350
  %vm352 = vcmp.eq.f32.partialorder %v349, %v351
  %v353 = vsel %vm352, %v348, inf
  %354 = vmin.xlane.f32.xlu0 %v353
  %v355 = vpop.xlane.xlu0 %354
  %v356 = vcvt.f32.s32 %v355
  %v357 = vcvt.f32.s32 %v351
  %v358 = vshll.u32 %v357, 16
  %v359 = vadd.s32 %v358, %v356
  %v360 = vand.u32 %v317, 65535
  %v361 = vshra.s32 %v317, 16
  %v362 = vcvt.s32.f32 %v360
  %v363 = vcvt.s32.f32 %v361
  %364 = vmin.xlane.f32.xlu0 %v363
  %v365 = vpop.xlane.xlu0 %364
  %vm366 = vcmp.eq.f32.partialorder %v363, %v365
  %v367 = vsel %vm366, %v362, inf
  %368 = vmin.xlane.f32.xlu0 %v367
  %v369 = vpop.xlane.xlu0 %368
  %v370 = vcvt.f32.s32 %v369
  %v371 = vcvt.f32.s32 %v365
  %v372 = vshll.u32 %v371, 16
  %v373 = vadd.s32 %v372, %v370
  %v374 = vsub.f32 %v277, %v303
  %v375 = vsub.f32 %v280, %v305
  %v376 = vsub.f32 %v285, %v307
  %v377 = vsub.f32 %v288, %v309
  %v378 = vmul.f32 %v374, 1.442695
  %v379 = vpow.pop %v378
  %v380 = vmul.f32 %v375, 1.442695
  %v381 = vpow.pop %v380
  %v382 = vmul.f32 %v376, 1.442695
  %v383 = vpow.pop %v382
  %v384 = vmul.f32 %v377, 1.442695
  %v385 = vpow.pop %v384
  %v386 = vsel %vm293, %v379, 0.0
  %v387 = vsel %vm293, %v381, 0.0
  %v388 = vsel %vm293, %v383, 0.0
  %v389 = vsel %vm293, %v385, 0.0
  %390 = vadd.xlane.f32.xlu0 %v386
  %v391 = vpop.xlane.xlu0 %390
  %392 = vadd.xlane.f32.xlu0 %v387
  %v393 = vpop.xlane.xlu0 %392
  %394 = vadd.xlane.f32.xlu0 %v388
  %v395 = vpop.xlane.xlu0 %394
  %396 = vadd.xlane.f32.xlu0 %v389
  %v397 = vpop.xlane.xlu0 %396
  %v398 = vlog2.pop %v391
  %v399 = vmul.f32 %v398, 0.6931472
  %v400 = vlog2.pop %v393
  %v401 = vmul.f32 %v400, 0.6931472
  %v402 = vlog2.pop %v395
  %v403 = vmul.f32 %v402, 0.6931472
  %v404 = vlog2.pop %v397
  %v405 = vmul.f32 %v404, 0.6931472
  %v406 = vadd.f32 %v303, %v399
  %v407 = vadd.f32 %v305, %v401
  %v408 = vadd.f32 %v307, %v403
  %v409 = vadd.f32 %v309, %v405
  %410 = vset.pattern.permute.xlu0 0
  %411 = vperm.xlu0 %410, %v294
  %v412 = vpop.permute.xlu0 %411
  %413 = vset.pattern.permute.xlu0 0
  %414 = vperm.xlu0 %413, %v295
  %v415 = vpop.permute.xlu0 %414
  %416 = vset.pattern.permute.xlu0 0
  %417 = vperm.xlu0 %416, %v296
  %v418 = vpop.permute.xlu0 %417
  %419 = vset.pattern.permute.xlu0 0
  %420 = vperm.xlu0 %419, %v297
  %v421 = vpop.permute.xlu0 %420
  %vm422 = vcmp.eq.s32.totalorder %v292, %v412
  %vm423 = vcmp.eq.s32.totalorder %v292, %v415
  %vm424 = vcmp.eq.s32.totalorder %v292, %v418
  %vm425 = vcmp.eq.s32.totalorder %v292, %v421
  %v426 = vsel %vm422, %v277, 0.0
  %v427 = vsel %vm423, %v280, 0.0
  %v428 = vsel %vm424, %v285, 0.0
  %v429 = vsel %vm425, %v288, 0.0
  %430 = vadd.xlane.f32.xlu0 %v426
  %v431 = vpop.xlane.xlu0 %430
  %432 = vadd.xlane.f32.xlu0 %v427
  %v433 = vpop.xlane.xlu0 %432
  %434 = vadd.xlane.f32.xlu0 %v428
  %v435 = vpop.xlane.xlu0 %434
  %436 = vadd.xlane.f32.xlu0 %v429
  %v437 = vpop.xlane.xlu0 %436
  %v438 = vsub.f32 %v406, %v431
  %v439 = vsub.f32 %v407, %v433
  %v440 = vsub.f32 %v408, %v435
  %v441 = vsub.f32 %v409, %v437
  %v442 = vsel %vm293, %v277, 0.0
  %v443 = vsel %vm293, %v280, 0.0
  %v444 = vsel %vm293, %v285, 0.0
  %v445 = vsel %vm293, %v288, 0.0
  %vm446 = vcmp.eq.s32.totalorder %v292, 8
  %v447 = vcvt.s32.f32 %v331
  %v448 = vcvt.s32.f32 %v345
  %v449 = vcvt.s32.f32 %v359
  %v450 = vcvt.s32.f32 %v373
  %v451 = vsel %vm446, %v447, %v442
  %v452 = vsel %vm446, %v448, %v443
  %v453 = vsel %vm446, %v449, %v444
  %v454 = vsel %vm446, %v450, %v445
  %vm455 = vcmp.eq.s32.totalorder %v292, 9
  %v456 = vsel %vm455, %v438, %v451
  %v457 = vsel %vm455, %v439, %v452
  %v458 = vsel %vm455, %v440, %v453
  %v459 = vsel %vm455, %v441, %v454
  %460 = vst [vmem:[%s8] sm:$0xff] %v456
  %461 = vst [vmem:[%s8 + $0x8] sm:$0xff] %v457
  %462 = vst [vmem:[%s8 + $0x10] sm:$0xff] %v458
  %463 = vst [vmem:[%s8 + $0x18] sm:$0xff] %v459
  // Predicated region
  $region34: #{adapter_forward.1} parent=0 // pred_check
    _
  $region35: #{adapter_forward.1} parent=0 // pred_check_branch
    %465 = sbr.rel (0) target = $region37
  $region36: #{adapter_forward.1} parent=0 // pred_region
    _
  $region37: #{adapter_forward.1} parent=0 // pred_fallthru
    _
  // Predicated region
  $region38: #{adapter_forward.1} parent=0 // pred_check
    _
  $region39: #{adapter_forward.1} parent=0 // pred_check_branch
    %467 = sbr.rel (0) target = $region41
  $region40: #{adapter_forward.1} parent=0 // pred_region
    _
  $region41: #{adapter_forward.1} parent=0 // pred_fallthru
    _

</llo_original>
